<compile_context>
chip_gen: v7x
topology: tpu7x:2x2x1
jax: 0.10.0
libtpu: 0.0.40
codegen_flags: <defaults>
</compile_context>

<pallas_src>
import jax
import jax.numpy as jnp
from jax import lax
from jax.experimental import pallas as pl
from jax.experimental.pallas import tpu as pltpu

_LANES = 128
_SMALL_N = 64 * 1024          # below this, fused XLA reduction beats pallas_call setup
_SUBLANES = {4: 8, 2: 16}     # sublane granule per itemsize (f32 / bf16,f16)


def _supported_dtype(dtype):
    return dtype in (jnp.float32, jnp.bfloat16, jnp.float16)


def _device_kind():
    try:
        return jax.devices()[0].device_kind.lower()
    except Exception:
        return ""


def _multi_tensorcore():
    """True on chips with >1 TensorCore per chip (v7x / v4 / v5p)."""
    kind = _device_kind()
    return ("v7" in kind) or ("v4" in kind) or ("v5p" in kind)


def _target_block_bytes():
    """Per-grid-step input block size (Pallas double-buffers it)."""
    kind = _device_kind()
    if ("v6" in kind) or ("v7" in kind):
        return 8 * 1024 * 1024   # 16 MiB double buffered; fits 32 MiB scoped default
    return 4 * 1024 * 1024       # v5e etc.: 8 MiB double buffered vs 16 MiB default


def _make_stats_kernel(sub, nparts, npp, ragged, valid_rows_last):
    def kernel(x_ref, min_ref, max_ref):
        p = pl.program_id(0)
        i = pl.program_id(1)

        @pl.when(i == 0)
        def _init():
            min_ref[...] = jnp.full_like(min_ref, jnp.inf)
            max_ref[...] = jnp.full_like(max_ref, -jnp.inf)

        blk = x_ref[...]  # (tile_rows, 128), native dtype

        def accumulate(lo, hi):
            # Fold block rows into the resident (sub, 128) accumulators:
            # pure elementwise vmin/vmax (VPU), no cross-lane work per step.
            min_ref[...] = jnp.minimum(
                min_ref[...], jnp.min(lo.reshape(-1, sub, _LANES), axis=0))
            max_ref[...] = jnp.maximum(
                max_ref[...], jnp.max(hi.reshape(-1, sub, _LANES), axis=0))

        if ragged:
            # Only the global last block extends past the end of the input; its
            # out-of-range rows hold undefined VMEM contents -> mask them with
            # neutral values (where() discards any garbage NaN; real NaNs in
            # the valid region still propagate through minimum/maximum).
            is_last = jnp.logical_and(p == nparts - 1, i == npp - 1)

            @pl.when(is_last)
            def _tail():
                row = lax.broadcasted_iota(jnp.int32, blk.shape, 0)
                keep = row < valid_rows_last
                accumulate(jnp.where(keep, blk, jnp.inf),
                           jnp.where(keep, blk, -jnp.inf))

            @pl.when(jnp.logical_not(is_last))
            def _full():
                accumulate(blk, blk)
        else:
            accumulate(blk, blk)

    return kernel


def _tensor_stats(x: jax.Array, *, max_block_bytes=None):
    """Global (min, max) of x as float32 scalars via a streaming Pallas reduction."""
    if x.size == 0:
        raise ValueError("PrintLayer: min/max of an empty tensor is undefined.")
    if not _supported_dtype(x.dtype):
        x = x.astype(jnp.float32)   # ints / f64 / fp8: widen for the debug stats

    flat = x.reshape(-1)
    n = flat.shape[0]

    # Tiny tensors: fixed pallas_call/grid setup dominates -> fused XLA reduction.
    if n < _SMALL_N:
        return jnp.min(flat).astype(jnp.float32), jnp.max(flat).astype(jnp.float32)

    itemsize = jnp.dtype(x.dtype).itemsize
    sub = _SUBLANES[itemsize]
    granule = sub * _LANES

    # Pad only up to a single (sub, 128) granule (edge mode replicates the last
    # element, which can never change min / max / finiteness).  Never pad to a
    # multiple of the tile: the ragged last block is masked in-kernel instead.
    n_pad = -(-n // granule) * granule
    if n_pad != n:
        flat = jnp.pad(flat, (0, n_pad - n), mode="edge")
    rows = n_pad // _LANES
    x2d = flat.reshape(rows, _LANES)

    block_bytes = _target_block_bytes() if max_block_bytes is None else max_block_bytes
    tile_rows = (block_bytes // (_LANES * itemsize)) // sub * sub
    tile_rows = max(sub, min(rows, tile_rows))
    nblocks = -(-rows // tile_rows)
    valid_rows_last = rows - (nblocks - 1) * tile_rows
    ragged = valid_rows_last != tile_rows

    # 2-way split across TensorCores on multi-TC chips (v7x etc.); one partial
    # (sub, 128) accumulator per core, combined in XLA below.
    nparts = 2 if (nblocks >= 2 and nblocks % 2 == 0 and _multi_tensorcore()) else 1
    npp = nblocks // nparts

    kernel = _make_stats_kernel(sub, nparts, npp, ragged, valid_rows_last)

    acc_shape = jax.ShapeDtypeStruct((nparts * sub, _LANES), x.dtype)
    out_acc_spec = pl.BlockSpec((sub, _LANES), lambda p, i: (p, 0))

    mn_tile, mx_tile = pl.pallas_call(
        kernel,
        out_shape=(acc_shape, acc_shape),
        grid_spec=pltpu.PrefetchScalarGridSpec(
            num_scalar_prefetch=0,
            grid=(nparts, npp),
            in_specs=[pl.BlockSpec((tile_rows, _LANES),
                                   lambda p, i: (p * npp + i, 0))],
            out_specs=(out_acc_spec, out_acc_spec),
        ),
        compiler_params=pltpu.CompilerParams(
            dimension_semantics=("parallel", "arbitrary")),
    )(x2d)

    # Tiny final collapse (<= 2 vregs per stat) in XLA; jnp.min/max propagate NaN.
    return jnp.min(mn_tile).astype(jnp.float32), jnp.max(mx_tile).astype(jnp.float32)


def _host_print(all_finite, mn, mx):
    print("torch.isfinite(x).all(): {}, min. {:.5f}, max. {:.5f}".format(
        bool(all_finite), float(mn), float(mx)))


def print_layer_forward(x: jax.Array) -> jax.Array:
    """Pallas equivalent of PrintLayer.forward: print finite/min/max, return x."""
    mn, mx = _tensor_stats(x)
    # NaN poisons min/max (propagating minimum/maximum); +/-inf shows up in
    # min/max directly -> all-finite needs no separate reduction.
    all_finite = jnp.logical_and(jnp.isfinite(mn), jnp.isfinite(mx))
    # Async host print: no blocking device->host fetch, works under jax.jit.
    jax.debug.callback(_host_print, all_finite, mn, mx)
    return x  # identity pass-through, no extra HBM copy of x


if __name__ == "__main__":
    key = jax.random.PRNGKey(0)

    # 1) Module-scale demo shape (batch=2, seq=8, d_model=32): identity + print
    #    (small-tensor fast path).
    batch, seq_len, d_model = 2, 8, 32
    x = jax.random.normal(key, (batch, seq_len, d_model), dtype=jnp.float32)
    out = jax.block_until_ready(print_layer_forward(x))
    assert out.shape == x.shape and jnp.array_equal(out, x)

    # 2) Pallas-kernel path: above the fast-path threshold, with a size that is
    #    neither a multiple of 1024 nor of the tile -> exercises the granule
    #    pad + ragged-last-block masking + multi-step accumulation.
    xk = jax.random.normal(jax.random.PRNGKey(1), (13, 97, 53), dtype=jnp.float32)
    mn, mx = jax.block_until_ready(_tensor_stats(xk, max_block_bytes=64 * 1024))
    assert float(mn) == float(jnp.min(xk)), "min mismatch"
    assert float(mx) == float(jnp.max(xk)), "max mismatch"

    # Default (large-block) config -> single-step path.
    mn_d, mx_d = jax.block_until_ready(_tensor_stats(xk))
    assert float(mn_d) == float(jnp.min(xk)) and float(mx_d) == float(jnp.max(xk))

    # bf16 native-dtype accumulation path ((16, 128) granule).
    xb = xk.astype(jnp.bfloat16)
    mn_b, mx_b = jax.block_until_ready(_tensor_stats(xb, max_block_bytes=64 * 1024))
    assert float(mn_b) == float(jnp.min(xb).astype(jnp.float32)), "bf16 min mismatch"
    assert float(mx_b) == float(jnp.max(xb).astype(jnp.float32)), "bf16 max mismatch"

    # 3) Non-finite detection (the module's raison d'etre).
    x_nan = xk.at[3, 5, 7].set(jnp.nan)
    mn_n, mx_n = jax.block_until_ready(_tensor_stats(x_nan, max_block_bytes=64 * 1024))
    assert bool(jnp.isnan(mn_n)) and bool(jnp.isnan(mx_n)), "NaN did not propagate"
    assert not bool(jnp.isfinite(mn_n) & jnp.isfinite(mx_n)), "NaN not detected"

    x_inf = xk.at[0, 0, 0].set(jnp.inf)
    mn_i, mx_i = jax.block_until_ready(_tensor_stats(x_inf, max_block_bytes=64 * 1024))
    assert bool(jnp.isinf(mx_i)), "inf not detected in max"
    assert not bool(jnp.isfinite(mn_i) & jnp.isfinite(mx_i)), "inf not detected"

    # 4) jit-compatibility of the full forward (print via jax.debug.callback).
    y = jax.block_until_ready(jax.jit(print_layer_forward)(xk))
    assert jnp.array_equal(y, xk)

    jax.effects_barrier()
    print("KERNEL_OK")
</pallas_src>

<mosaic_0001>
module attributes {stable_mosaic.version = 11 : i64} {
  func.func @kernel(%arg0: i32, %arg1: i32, %arg2: memref<128x128xf32, #tpu.memory_space<vmem>>, %arg3: memref<8x128xf32, #tpu.memory_space<vmem>>, %arg4: memref<8x128xf32, #tpu.memory_space<vmem>>) attributes {dimension_semantics = [#tpu.dimension_semantics<parallel>, #tpu.dimension_semantics<arbitrary>], iteration_bounds = array<i64: 1, 5>, scalar_prefetch = 0 : i64, scratch_operands = 0 : i64, tpu.core_type = #tpu.core_type<tc>, window_params = [{transform_indices = @transform_0, window_bounds = array<i64: 128, 128>}, {transform_indices = @transform_1, window_bounds = array<i64: 8, 128>}, {transform_indices = @transform_2, window_bounds = array<i64: 8, 128>}]} {
    %c0_i32 = arith.constant 0 : i32
    %0 = arith.cmpi eq, %arg1, %c0_i32 : i32
    %1 = arith.extui %0 : i1 to i32
    %c0_i32_0 = arith.constant 0 : i32
    %2 = arith.cmpi ne, %1, %c0_i32_0 : i32
    scf.if %2 {
      %cst = arith.constant 0x7F800000 : f32
      %12 = vector.broadcast %cst : f32 to vector<8x128xf32>
      %c0_5 = arith.constant 0 : index
      %c0_6 = arith.constant 0 : index
      %13 = vector.load %arg3[%c0_5, %c0_6] : memref<8x128xf32, #tpu.memory_space<vmem>>, vector<8x128xf32>
      tpu.vector_store %arg3[%c0_5, %c0_6], %12 {strides = array<i32>} : memref<8x128xf32, #tpu.memory_space<vmem>>, vector<8x128xf32>,
      %cst_7 = arith.constant 0xFF800000 : f32
      %14 = vector.broadcast %cst_7 : f32 to vector<8x128xf32>
      %c0_8 = arith.constant 0 : index
      %c0_9 = arith.constant 0 : index
      %15 = vector.load %arg4[%c0_8, %c0_9] : memref<8x128xf32, #tpu.memory_space<vmem>>, vector<8x128xf32>
      tpu.vector_store %arg4[%c0_8, %c0_9], %14 {strides = array<i32>} : memref<8x128xf32, #tpu.memory_space<vmem>>, vector<8x128xf32>,
    } else {
    }
    %c0 = arith.constant 0 : index
    %c0_1 = arith.constant 0 : index
    %3 = vector.load %arg2[%c0, %c0_1] : memref<128x128xf32, #tpu.memory_space<vmem>>, vector<128x128xf32>
    %c0_i32_2 = arith.constant 0 : i32
    %4 = arith.cmpi eq, %arg0, %c0_i32_2 : i32
    %c4_i32 = arith.constant 4 : i32
    %5 = arith.cmpi eq, %arg1, %c4_i32 : i32
    %6 = arith.andi %4, %5 : i1
    %7 = arith.extui %6 : i1 to i32
    %c0_i32_3 = arith.constant 0 : i32
    %8 = arith.cmpi ne, %7, %c0_i32_3 : i32
    scf.if %8 {
      %12 = tpu.iota {dimensions = array<i32: 0>} : vector<128x128xi32>
      %c16_i32 = arith.constant 16 : i32
      %13 = vector.broadcast %c16_i32 : i32 to vector<128x128xi32>
      %14 = arith.cmpi slt, %12, %13 : vector<128x128xi32>
      %cst = arith.constant 0x7F800000 : f32
      %15 = vector.broadcast %cst : f32 to vector<128x128xf32>
      %16 = arith.select %14, %3, %15 : vector<128x128xi1>, vector<128x128xf32>
      %cst_5 = arith.constant 0xFF800000 : f32
      %17 = vector.broadcast %cst_5 : f32 to vector<128x128xf32>
      %18 = arith.select %14, %3, %17 : vector<128x128xi1>, vector<128x128xf32>
      %c0_6 = arith.constant 0 : index
      %c0_7 = arith.constant 0 : index
      %19 = vector.load %arg3[%c0_6, %c0_7] : memref<8x128xf32, #tpu.memory_space<vmem>>, vector<8x128xf32>
      %20 = vector.shape_cast %16 : vector<128x128xf32> to vector<16x8x128xf32>
      %cst_8 = arith.constant dense<0x7F800000> : vector<8x128xf32>
      %21 = vector.multi_reduction <minimumf>, %20, %cst_8 [0] : vector<16x8x128xf32> to vector<8x128xf32>
      %22 = arith.minimumf %19, %21 : vector<8x128xf32>
      %c0_9 = arith.constant 0 : index
      %c0_10 = arith.constant 0 : index
      %23 = vector.load %arg3[%c0_9, %c0_10] : memref<8x128xf32, #tpu.memory_space<vmem>>, vector<8x128xf32>
      tpu.vector_store %arg3[%c0_9, %c0_10], %22 {strides = array<i32>} : memref<8x128xf32, #tpu.memory_space<vmem>>, vector<8x128xf32>,
      %c0_11 = arith.constant 0 : index
      %c0_12 = arith.constant 0 : index
      %24 = vector.load %arg4[%c0_11, %c0_12] : memref<8x128xf32, #tpu.memory_space<vmem>>, vector<8x128xf32>
      %25 = vector.shape_cast %18 : vector<128x128xf32> to vector<16x8x128xf32>
      %cst_13 = arith.constant dense<0xFF800000> : vector<8x128xf32>
      %26 = vector.multi_reduction <maximumf>, %25, %cst_13 [0] : vector<16x8x128xf32> to vector<8x128xf32>
      %27 = arith.maximumf %24, %26 : vector<8x128xf32>
      %c0_14 = arith.constant 0 : index
      %c0_15 = arith.constant 0 : index
      %28 = vector.load %arg4[%c0_14, %c0_15] : memref<8x128xf32, #tpu.memory_space<vmem>>, vector<8x128xf32>
      tpu.vector_store %arg4[%c0_14, %c0_15], %27 {strides = array<i32>} : memref<8x128xf32, #tpu.memory_space<vmem>>, vector<8x128xf32>,
    } else {
    }
    %true = arith.constant true
    %9 = arith.xori %6, %true : i1
    %10 = arith.extui %9 : i1 to i32
    %c0_i32_4 = arith.constant 0 : i32
    %11 = arith.cmpi ne, %10, %c0_i32_4 : i32
    scf.if %11 {
      %c0_5 = arith.constant 0 : index
      %c0_6 = arith.constant 0 : index
      %12 = vector.load %arg3[%c0_5, %c0_6] : memref<8x128xf32, #tpu.memory_space<vmem>>, vector<8x128xf32>
      %13 = vector.shape_cast %3 : vector<128x128xf32> to vector<16x8x128xf32>
      %cst = arith.constant dense<0x7F800000> : vector<8x128xf32>
      %14 = vector.multi_reduction <minimumf>, %13, %cst [0] : vector<16x8x128xf32> to vector<8x128xf32>
      %15 = arith.minimumf %12, %14 : vector<8x128xf32>
      %c0_7 = arith.constant 0 : index
      %c0_8 = arith.constant 0 : index
      %16 = vector.load %arg3[%c0_7, %c0_8] : memref<8x128xf32, #tpu.memory_space<vmem>>, vector<8x128xf32>
      tpu.vector_store %arg3[%c0_7, %c0_8], %15 {strides = array<i32>} : memref<8x128xf32, #tpu.memory_space<vmem>>, vector<8x128xf32>,
      %c0_9 = arith.constant 0 : index
      %c0_10 = arith.constant 0 : index
      %17 = vector.load %arg4[%c0_9, %c0_10] : memref<8x128xf32, #tpu.memory_space<vmem>>, vector<8x128xf32>
      %18 = vector.shape_cast %3 : vector<128x128xf32> to vector<16x8x128xf32>
      %cst_11 = arith.constant dense<0xFF800000> : vector<8x128xf32>
      %19 = vector.multi_reduction <maximumf>, %18, %cst_11 [0] : vector<16x8x128xf32> to vector<8x128xf32>
      %20 = arith.maximumf %17, %19 : vector<8x128xf32>
      %c0_12 = arith.constant 0 : index
      %c0_13 = arith.constant 0 : index
      %21 = vector.load %arg4[%c0_12, %c0_13] : memref<8x128xf32, #tpu.memory_space<vmem>>, vector<8x128xf32>
      tpu.vector_store %arg4[%c0_12, %c0_13], %20 {strides = array<i32>} : memref<8x128xf32, #tpu.memory_space<vmem>>, vector<8x128xf32>,
    } else {
    }
    return
  }
  func.func @transform_0(%arg0: i32, %arg1: i32) -> (i32, i32) {
    %c5_i32 = arith.constant 5 : i32
    %0 = arith.muli %arg0, %c5_i32 : i32
    %1 = arith.addi %0, %arg1 : i32
    %c0_i32 = arith.constant 0 : i32
    %c0_i32_0 = arith.constant 0 : i32
    return %1, %c0_i32 : i32, i32
  }
  func.func @transform_1(%arg0: i32, %arg1: i32) -> (i32, i32) {
    %c0_i32 = arith.constant 0 : i32
    %c0_i32_0 = arith.constant 0 : i32
    return %arg0, %c0_i32 : i32, i32
  }
  func.func @transform_2(%arg0: i32, %arg1: i32) -> (i32, i32) {
    %c0_i32 = arith.constant 0 : i32
    %c0_i32_0 = arith.constant 0 : i32
    return %arg0, %c0_i32 : i32, i32
  }
}

</mosaic_0001>

<llo_original>
// kernel: tpu_custom_call.1
$region0: #{tpu_custom_call.1}
  #allocation0 [shape = 'u32[]', space=smem, size = 0x4, offset = 0x4, fixed_abs, tag = 'smem constant byte address 0x4 - core index']
  #allocation1 [shape = 'u32[144,128]{1,0:T(1,128)}', space=vmem, size = 0x12000, scoped, tag = 'internal scratch']
  %s0 = inlined_call_operand.hbm [shape: f32[528,128], index: 0, kind: input, shape index: {}]
  %s1 = inlined_call_operand.hbm [shape: f32[8,128], index: 1, kind: output, shape index: {0}]
  %s2 = inlined_call_operand.hbm [shape: f32[8,128], index: 2, kind: output, shape index: {1}]
  %3 = xla_tuple %s1, %s2
  %s4 = sld [smem:[#allocation0]]
  $region61: #{tpu_custom_call.1} parent=0
    _
  %s6 = ssub.s32 1, %s4
  %s7 = scalar_select 0, %s6, %s4
  $region1: #{tpu_custom_call.1} parent=0
    #allocation2 [shape = 'u8[131072]{0}', space=vmem, size = 0x20000, scoped, tag = 'input window, operand 0']
    #allocation3 [shape = 's32[2]{0}', space=sflag, size = 0x8, scoped, tag = 'scoped memory for tpu_custom_call.1']
    #allocation4 [shape = 's32[2]{0}', space=sflag, size = 0x8, scoped, tag = 'scoped memory for tpu_custom_call.1']
    #allocation5 [shape = 'u8[4096]{0}', space=vmem, size = 0x1000, scoped, tag = 'output window, operand 0, single buffered']
    #allocation6 [shape = 'u8[4096]{0}', space=vmem, size = 0x1000, scoped, tag = 'output window, operand 1, single buffered']
    #allocation7 [shape = 's32[1]{0}', space=sflag, size = 0x4, scoped, tag = 'scoped memory for tpu_custom_call.1']
    %8 = vsyncpa [#allocation3], 0
    %s9 = scalar_lea.sflag [#allocation3], 1
    %10 = vsyncpa %s9, 0
    %11 = vsyncpa [#allocation4], 0
    %12 = vsyncpa [#allocation7], 0
    loop: start=0, step=1, limit=7
    $region2: #{tpu_custom_call.1} parent=1 // loop_pre_header
      _
    $region3: #{tpu_custom_call.1} parent=1 // loop_header
      %s14 = sphi 0, %s18
      %p15 = scmp.ge.s32.totalorder %s14, 7
      %s21 = sphi 0, %s33
      %s22 = sphi 0, %s29
      %s23 = sphi 0, %s21
      %s24 = sphi 0, %s22
      %s25 = sphi 0, %s23
      %s26 = sphi 0, %s24
      %s40 = sphi 0, %s42
      %s43 = sphi 0, %s40
      %s44 = sphi 0, %s43
      %s60 = sphi 0, %s44
      %s66 = sphi 0, %s68
      %s69 = sphi 0, %s66
      %s70 = sphi 0, %s69
      %s86 = sphi 0, %s70
      %s92 = sphi 0, %s94
      %s95 = sphi 0, %s92
      %s96 = sphi 0, %s95
      %s112 = sphi 0, %s96
    $region4: #{tpu_custom_call.1} parent=1 // loop_header_branch
      %17 = sbr.rel (%p15) target = $region8
    $region5: #{tpu_custom_call.1} parent=1 // loop_body
      %s19 = ssub.s32 %s14, 1
      %s20 = ssub.s32 %s14, 2
      %s27 = sadd.s32 1, %s22
      %p28 = scmp.ge.s32.totalorder %s27, 5
      %s29 = scalar_select %p28, 0, %s27
      %s30 = sadd.s32 1, %s21
      %s31 = scalar_select %p28, %s30, %s21
      %p32 = scmp.ge.s32.totalorder %s31, 1
      %s33 = scalar_select %p32, 0, %s31
      %s34 = smul.u32 %s21, 5
      %s35 = sadd.s32 %s34, %s22
      %s36 = smul.u32 %s33, 5
      %s37 = sadd.s32 %s36, %s29
      %s38 = ssub.s32 %s35, %s37
      %p39 = scmp.eq.s32.totalorder %s38, 0
      %s41 = sadd.s32 %s40, 1
      %s42 = scalar_select %p39, %s40, %s41
      %p45 = pneg %p39
      %p46 = scmp.eq.s32.totalorder %s14, 4
      %p47 = por %p45, %p46
      %p48 = scmp.ne.s32.totalorder %s40, %s43
      %p49 = scmp.eq.s32.totalorder %s14, 0
      %p50 = por %p48, %p49
      %p51 = scmp.ne.s32.totalorder %s40, %s43
      %p52 = scmp.eq.s32.totalorder %s19, 4
      %p53 = por %p51, %p52
      %p54 = scmp.ne.s32.totalorder %s43, %s44
      %p55 = scmp.eq.s32.totalorder %s19, 0
      %p56 = por %p54, %p55
      %p57 = scmp.ne.s32.totalorder %s43, %s44
      %p58 = scmp.eq.s32.totalorder %s20, 4
      %p59 = por %p57, %p58
      %p61 = scmp.ne.s32.totalorder %s44, %s60
      %p62 = scmp.eq.s32.totalorder %s20, 0
      %p63 = por %p61, %p62
      %s64 = ssub.s32 %s21, %s33
      %p65 = scmp.eq.s32.totalorder %s64, 0
      %s67 = sadd.s32 %s66, 1
      %s68 = scalar_select %p65, %s66, %s67
      %p71 = pneg %p65
      %p72 = scmp.eq.s32.totalorder %s14, 4
      %p73 = por %p71, %p72
      %p74 = scmp.ne.s32.totalorder %s66, %s69
      %p75 = scmp.eq.s32.totalorder %s14, 0
      %p76 = por %p74, %p75
      %p77 = scmp.ne.s32.totalorder %s66, %s69
      %p78 = scmp.eq.s32.totalorder %s19, 4
      %p79 = por %p77, %p78
      %p80 = scmp.ne.s32.totalorder %s69, %s70
      %p81 = scmp.eq.s32.totalorder %s19, 0
      %p82 = por %p80, %p81
      %p83 = scmp.ne.s32.totalorder %s69, %s70
      %p84 = scmp.eq.s32.totalorder %s20, 4
      %p85 = por %p83, %p84
      %p87 = scmp.ne.s32.totalorder %s70, %s86
      %p88 = scmp.eq.s32.totalorder %s20, 0
      %p89 = por %p87, %p88
      %s90 = ssub.s32 %s21, %s33
      %p91 = scmp.eq.s32.totalorder %s90, 0
      %s93 = sadd.s32 %s92, 1
      %s94 = scalar_select %p91, %s92, %s93
      %p97 = pneg %p91
      %p98 = scmp.eq.s32.totalorder %s14, 4
      %p99 = por %p97, %p98
      %p100 = scmp.ne.s32.totalorder %s92, %s95
      %p101 = scmp.eq.s32.totalorder %s14, 0
      %p102 = por %p100, %p101
      %p103 = scmp.ne.s32.totalorder %s92, %s95
      %p104 = scmp.eq.s32.totalorder %s19, 4
      %p105 = por %p103, %p104
      %p106 = scmp.ne.s32.totalorder %s95, %s96
      %p107 = scmp.eq.s32.totalorder %s19, 0
      %p108 = por %p106, %p107
      %p109 = scmp.ne.s32.totalorder %s95, %s96
      %p110 = scmp.eq.s32.totalorder %s20, 4
      %p111 = por %p109, %p110
      %p113 = scmp.ne.s32.totalorder %s96, %s112
      %p114 = scmp.eq.s32.totalorder %s20, 0
      %p115 = por %p113, %p114
      %p116 = scmp.le.s32.totalorder 1, %s14
      %p117 = scmp.lt.s32.totalorder %s14, 6
      %p118 = pnand %p116, %p117
      %p119 = pneg %p118
      // Predicated region
      $region9: #{tpu_custom_call.1} parent=5 // pred_check
        _
      $region10: #{tpu_custom_call.1} parent=5 // pred_check_branch
        %121 = sbr.rel (%p118) target = $region12
      $region11: #{tpu_custom_call.1} parent=5 // pred_region
        %s122 = ssub.s32 %s14, 1
      $region12: #{tpu_custom_call.1} parent=5 // pred_fallthru
        _
      %p123 = scmp.lt.s32.totalorder %s14, 5
      // Predicated region
      $region13: #{tpu_custom_call.1} parent=5 // pred_check
        %p124 = pneg %p123
      $region14: #{tpu_custom_call.1} parent=5 // pred_check_branch
        %126 = sbr.rel (%p124) target = $region16
      $region15: #{tpu_custom_call.1} parent=5 // pred_region
        // Predicated region
        $region17: #{tpu_custom_call.1} parent=15 // pred_check
          %p127 = pneg %p50
        $region18: #{tpu_custom_call.1} parent=15 // pred_check_branch
          %129 = sbr.rel (%p127) target = $region20
        $region19: #{tpu_custom_call.1} parent=15 // pred_region
          %s130 = sand.u32 %s40, 1
          %s131 = scalar_lea.sflag [#allocation3], %s130
          %s132 = sand.u32 %s40, 1
          %s133 = smul.addr %s132, 128
          %s134 = scalar_lea.vmem [#allocation2], %s133
          %s135 = smul.u32 %s21, 5
          %s136 = sadd.s32 %s135, %s22
          %s137 = smul.u32 16, %s136
          %s138 = ssub.s32 66, %s137
          %p139 = scmp.lt.s32.totalorder %s138, 16
          %s140 = scalar_select %p139, %s138, 16
          %s141 = smul.u32 128, %s140
          %s143 = ssub.s32 2048, %s141
          %144 = vsyncadd %s131, %s143
          %p145 = scmp.ne.s32.totalorder 0, %s141
          %s146 = smul.addr %s137, 128
          %s147 = scalar_lea.hbm %s0, %s146
          %s148 = smul.u32 8, %s140
          %s149 = sshll.u32 %s134, 4
          %s150 = int_to_ptr.vmem [resolvable:$true] %s149
          %s151 = sshll.u32 %s148, 4
          %155 = dma.hbm_to_vmem [thread:$0]  (%p145), %s147, %s151, %s150, %s131, 128, 128, 8
        $region20: #{tpu_custom_call.1} parent=15 // pred_fallthru
          _
      $region16: #{tpu_custom_call.1} parent=5 // pred_fallthru
        _
      %p156 = scmp.le.s32.totalorder 1, %s14
      %p157 = scmp.lt.s32.totalorder %s14, 6
      %p158 = pnand %p156, %p157
      %p159 = pneg %p158
      // Predicated region
      $region21: #{tpu_custom_call.1} parent=5 // pred_check
        _
      $region22: #{tpu_custom_call.1} parent=5 // pred_check_branch
        %161 = sbr.rel (%p158) target = $region24
      $region23: #{tpu_custom_call.1} parent=5 // pred_region
        %s162 = ssub.s32 %s14, 1
        %s163 = sand.u32 %s43, 1
        %s164 = scalar_lea.sflag [#allocation3], %s163
        %s165 = sand.u32 %s43, 1
        %s166 = smul.addr %s165, 128
        %s167 = scalar_lea.vmem [#allocation2], %s166
        // Predicated region
        $region25: #{tpu_custom_call.1} parent=23 // pred_check
          %p168 = pneg %p56
        $region26: #{tpu_custom_call.1} parent=23 // pred_check_branch
          %170 = sbr.rel (%p168) target = $region28
        $region27: #{tpu_custom_call.1} parent=23 // pred_region
          %171 = dma.done %s164, 2048
        $region28: #{tpu_custom_call.1} parent=23 // pred_fallthru
          _
        %s172 = sand.u32 %s43, 1
        %s173 = scalar_lea.sflag [#allocation3], %s172
        %s174 = sand.u32 %s43, 1
        %s175 = smul.addr %s174, 128
        %s176 = scalar_lea.vmem [#allocation2], %s175
        %p177 = pneg %p56
        %p178 = pneg %p53
        %p179 = pneg %p82
        %p180 = pneg %p79
        %p181 = pneg %p108
        %p182 = pneg %p105
        %s183 = smul.u32 %s23, 5
        %s184 = sadd.s32 %s183, %s24
        %s185 = smul.u32 16, %s184
        %s186 = ssub.s32 66, %s185
        %p187 = scmp.lt.s32.totalorder %s186, 16
        %s188 = scalar_select %p187, %s186, 16
        %s189 = smul.u32 128, %s188
        %p190 = scmp.eq.s32.totalorder %s24, 0
        // Predicated region
        $region29: #{tpu_custom_call.1} parent=23 // pred_check
          %p191 = pneg %p190
        $region30: #{tpu_custom_call.1} parent=23 // pred_check_branch
          %193 = sbr.rel (%p191) target = $region32
        $region31: #{tpu_custom_call.1} parent=23 // pred_region
          %194 = vst [vmem:[#allocation5] sm:$0xff] inf
          %195 = vst [vmem:[#allocation6] sm:$0xff] -inf
        $region32: #{tpu_custom_call.1} parent=23 // pred_fallthru
          _
        %v196 = vld [vmem:[%s167] sm:$0xff]
        %v197 = vld [vmem:[%s167 + $0x8] sm:$0xff]
        %v198 = vld [vmem:[%s167 + $0x10] sm:$0xff]
        %v199 = vld [vmem:[%s167 + $0x18] sm:$0xff]
        %v200 = vld [vmem:[%s167 + $0x20] sm:$0xff]
        %v201 = vld [vmem:[%s167 + $0x28] sm:$0xff]
        %v202 = vld [vmem:[%s167 + $0x30] sm:$0xff]
        %v203 = vld [vmem:[%s167 + $0x38] sm:$0xff]
        %v204 = vld [vmem:[%s167 + $0x40] sm:$0xff]
        %v205 = vld [vmem:[%s167 + $0x48] sm:$0xff]
        %v206 = vld [vmem:[%s167 + $0x50] sm:$0xff]
        %v207 = vld [vmem:[%s167 + $0x58] sm:$0xff]
        %v208 = vld [vmem:[%s167 + $0x60] sm:$0xff]
        %v209 = vld [vmem:[%s167 + $0x68] sm:$0xff]
        %v210 = vld [vmem:[%s167 + $0x70] sm:$0xff]
        %v211 = vld [vmem:[%s167 + $0x78] sm:$0xff]
        %p212 = scmp.eq.s32.totalorder %s23, 0
        %p213 = scmp.eq.s32.totalorder %s24, 4
        %p214 = pnand %p212, %p213
        %p215 = pneg %p214
        // Predicated region
        $region33: #{tpu_custom_call.1} parent=23 // pred_check
          _
        $region34: #{tpu_custom_call.1} parent=23 // pred_check_branch
          %217 = sbr.rel (%p214) target = $region36
        $region35: #{tpu_custom_call.1} parent=23 // pred_region
          %v218 = vlaneseq
          %v219 = vshrl.u32 %v218, 7
          %v220 = vadd.s32 %v219, 8
          %v221 = vadd.s32 %v219, 16
          %v222 = vadd.s32 %v219, 24
          %v223 = vadd.s32 %v219, 32
          %v224 = vadd.s32 %v219, 40
          %v225 = vadd.s32 %v219, 48
          %v226 = vadd.s32 %v219, 56
          %v227 = vadd.s32 %v219, 64
          %v228 = vadd.s32 %v219, 72
          %v229 = vadd.s32 %v219, 80
          %v230 = vadd.s32 %v219, 88
          %v231 = vadd.s32 %v219, 96
          %v232 = vadd.s32 %v219, 104
          %v233 = vadd.s32 %v219, 112
          %v234 = vadd.s32 %v219, 120
          %vm235 = vcmp.lt.s32.totalorder %v219, 16
          %vm236 = vcmp.lt.s32.totalorder %v220, 16
          %vm237 = vcmp.lt.s32.totalorder %v221, 16
          %vm238 = vcmp.lt.s32.totalorder %v222, 16
          %vm239 = vcmp.lt.s32.totalorder %v223, 16
          %vm240 = vcmp.lt.s32.totalorder %v224, 16
          %vm241 = vcmp.lt.s32.totalorder %v225, 16
          %vm242 = vcmp.lt.s32.totalorder %v226, 16
          %vm243 = vcmp.lt.s32.totalorder %v227, 16
          %vm244 = vcmp.lt.s32.totalorder %v228, 16
          %vm245 = vcmp.lt.s32.totalorder %v229, 16
          %vm246 = vcmp.lt.s32.totalorder %v230, 16
          %vm247 = vcmp.lt.s32.totalorder %v231, 16
          %vm248 = vcmp.lt.s32.totalorder %v232, 16
          %vm249 = vcmp.lt.s32.totalorder %v233, 16
          %vm250 = vcmp.lt.s32.totalorder %v234, 16
          %v251 = vsel %vm235, %v196, inf
          %v252 = vsel %vm236, %v197, inf
          %v253 = vsel %vm237, %v198, inf
          %v254 = vsel %vm238, %v199, inf
          %v255 = vsel %vm239, %v200, inf
          %v256 = vsel %vm240, %v201, inf
          %v257 = vsel %vm241, %v202, inf
          %v258 = vsel %vm242, %v203, inf
          %v259 = vsel %vm243, %v204, inf
          %v260 = vsel %vm244, %v205, inf
          %v261 = vsel %vm245, %v206, inf
          %v262 = vsel %vm246, %v207, inf
          %v263 = vsel %vm247, %v208, inf
          %v264 = vsel %vm248, %v209, inf
          %v265 = vsel %vm249, %v210, inf
          %v266 = vsel %vm250, %v211, inf
          %v267 = vsel %vm235, %v196, -inf
          %v268 = vsel %vm236, %v197, -inf
          %v269 = vsel %vm237, %v198, -inf
          %v270 = vsel %vm238, %v199, -inf
          %v271 = vsel %vm239, %v200, -inf
          %v272 = vsel %vm240, %v201, -inf
          %v273 = vsel %vm241, %v202, -inf
          %v274 = vsel %vm242, %v203, -inf
          %v275 = vsel %vm243, %v204, -inf
          %v276 = vsel %vm244, %v205, -inf
          %v277 = vsel %vm245, %v206, -inf
          %v278 = vsel %vm246, %v207, -inf
          %v279 = vsel %vm247, %v208, -inf
          %v280 = vsel %vm248, %v209, -inf
          %v281 = vsel %vm249, %v210, -inf
          %v282 = vsel %vm250, %v211, -inf
          %v283 = vld [vmem:[#allocation5] sm:$0xff]
          %v284 = vmin.f32 %v251, %v255
          %v285 = vmin.f32 %v252, %v256
          %v286 = vmin.f32 %v253, %v257
          %v287 = vmin.f32 %v254, %v258
          %v288 = vmin.f32 %v284, %v259
          %v289 = vmin.f32 %v285, %v260
          %v290 = vmin.f32 %v286, %v261
          %v291 = vmin.f32 %v287, %v262
          %v292 = vmin.f32 %v288, %v263
          %v293 = vmin.f32 %v289, %v264
          %v294 = vmin.f32 %v290, %v265
          %v295 = vmin.f32 %v291, %v266
          %v296 = vmin.f32 %v292, %v293
          %v297 = vmin.f32 %v294, %v295
          %v298 = vmin.f32 %v296, %v297
          %v299 = vmin.f32 %v283, %v298
          %300 = vst [vmem:[#allocation5] sm:$0xff] %v299
          %v301 = vld [vmem:[#allocation6] sm:$0xff]
          %v302 = vmax.f32 %v267, %v271
          %v303 = vmax.f32 %v268, %v272
          %v304 = vmax.f32 %v269, %v273
          %v305 = vmax.f32 %v270, %v274
          %v306 = vmax.f32 %v302, %v275
          %v307 = vmax.f32 %v303, %v276
          %v308 = vmax.f32 %v304, %v277
          %v309 = vmax.f32 %v305, %v278
          %v310 = vmax.f32 %v306, %v279
          %v311 = vmax.f32 %v307, %v280
          %v312 = vmax.f32 %v308, %v281
          %v313 = vmax.f32 %v309, %v282
          %v314 = vmax.f32 %v310, %v311
          %v315 = vmax.f32 %v312, %v313
          %v316 = vmax.f32 %v314, %v315
          %v317 = vmax.f32 %v301, %v316
          %318 = vst [vmem:[#allocation6] sm:$0xff] %v317
        $region36: #{tpu_custom_call.1} parent=23 // pred_fallthru
          _
        %p319 = pneg %p215
        // Predicated region
        $region37: #{tpu_custom_call.1} parent=23 // pred_check
          _
        $region38: #{tpu_custom_call.1} parent=23 // pred_check_branch
          %321 = sbr.rel (%p215) target = $region40
        $region39: #{tpu_custom_call.1} parent=23 // pred_region
          %v322 = vld [vmem:[#allocation5] sm:$0xff]
          %v323 = vmin.f32 %v196, %v200
          %v324 = vmin.f32 %v197, %v201
          %v325 = vmin.f32 %v198, %v202
          %v326 = vmin.f32 %v199, %v203
          %v327 = vmin.f32 %v323, %v204
          %v328 = vmin.f32 %v324, %v205
          %v329 = vmin.f32 %v325, %v206
          %v330 = vmin.f32 %v326, %v207
          %v331 = vmin.f32 %v327, %v208
          %v332 = vmin.f32 %v328, %v209
          %v333 = vmin.f32 %v329, %v210
          %v334 = vmin.f32 %v330, %v211
          %v335 = vmin.f32 %v331, %v332
          %v336 = vmin.f32 %v333, %v334
          %v337 = vmin.f32 %v335, %v336
          %v338 = vmin.f32 %v322, %v337
          %339 = vst [vmem:[#allocation5] sm:$0xff] %v338
          %v340 = vld [vmem:[#allocation6] sm:$0xff]
          %v341 = vmax.f32 %v196, %v200
          %v342 = vmax.f32 %v197, %v201
          %v343 = vmax.f32 %v198, %v202
          %v344 = vmax.f32 %v199, %v203
          %v345 = vmax.f32 %v341, %v204
          %v346 = vmax.f32 %v342, %v205
          %v347 = vmax.f32 %v343, %v206
          %v348 = vmax.f32 %v344, %v207
          %v349 = vmax.f32 %v345, %v208
          %v350 = vmax.f32 %v346, %v209
          %v351 = vmax.f32 %v347, %v210
          %v352 = vmax.f32 %v348, %v211
          %v353 = vmax.f32 %v349, %v350
          %v354 = vmax.f32 %v351, %v352
          %v355 = vmax.f32 %v353, %v354
          %v356 = vmax.f32 %v340, %v355
          %357 = vst [vmem:[#allocation6] sm:$0xff] %v356
        $region40: #{tpu_custom_call.1} parent=23 // pred_fallthru
          _
        // Predicated region
        $region41: #{tpu_custom_call.1} parent=23 // pred_check
          %p358 = pneg %p79
        $region42: #{tpu_custom_call.1} parent=23 // pred_check_branch
          %360 = sbr.rel (%p358) target = $region44
        $region43: #{tpu_custom_call.1} parent=23 // pred_region
          %s362 = ssub.s32 128, 128
          %363 = vsyncadd [#allocation4], %s362
          %s364 = smul.addr %s23, 128
          %s365 = scalar_lea.hbm %s1, %s364
          %s367 = sshll.u32 [#allocation5], 4
          %s368 = int_to_ptr.vmem [resolvable:$true] %s367
          %370 = dma.vmem_to_hbm [thread:$0]  %s368, 128, %s365, [#allocation4]
        $region44: #{tpu_custom_call.1} parent=23 // pred_fallthru
          _
        // Predicated region
        $region45: #{tpu_custom_call.1} parent=23 // pred_check
          %p371 = pneg %p105
        $region46: #{tpu_custom_call.1} parent=23 // pred_check_branch
          %373 = sbr.rel (%p371) target = $region48
        $region47: #{tpu_custom_call.1} parent=23 // pred_region
          %s375 = ssub.s32 128, 128
          %376 = vsyncadd [#allocation7], %s375
          %s377 = smul.addr %s23, 128
          %s378 = scalar_lea.hbm %s2, %s377
          %s380 = sshll.u32 [#allocation6], 4
          %s381 = int_to_ptr.vmem [resolvable:$true] %s380
          %383 = dma.vmem_to_hbm [thread:$0]  %s381, 128, %s378, [#allocation7]
        $region48: #{tpu_custom_call.1} parent=23 // pred_fallthru
          _
        // Predicated region
        $region49: #{tpu_custom_call.1} parent=23 // pred_check
          %p384 = pneg %p79
        $region50: #{tpu_custom_call.1} parent=23 // pred_check_branch
          %386 = sbr.rel (%p384) target = $region52
        $region51: #{tpu_custom_call.1} parent=23 // pred_region
          %387 = dma.done [#allocation4], 128
        $region52: #{tpu_custom_call.1} parent=23 // pred_fallthru
          _
        // Predicated region
        $region53: #{tpu_custom_call.1} parent=23 // pred_check
          %p388 = pneg %p105
        $region54: #{tpu_custom_call.1} parent=23 // pred_check_branch
          %390 = sbr.rel (%p388) target = $region56
        $region55: #{tpu_custom_call.1} parent=23 // pred_region
          %391 = dma.done [#allocation7], 128
        $region56: #{tpu_custom_call.1} parent=23 // pred_fallthru
          _
      $region24: #{tpu_custom_call.1} parent=5 // pred_fallthru
        _
      %p392 = scmp.le.s32.totalorder 2, %s14
      // Predicated region
      $region57: #{tpu_custom_call.1} parent=5 // pred_check
        %p393 = pneg %p392
      $region58: #{tpu_custom_call.1} parent=5 // pred_check_branch
        %395 = sbr.rel (%p393) target = $region60
      $region59: #{tpu_custom_call.1} parent=5 // pred_region
        %s396 = ssub.s32 %s14, 2
      $region60: #{tpu_custom_call.1} parent=5 // pred_fallthru
        _
    $region6: #{tpu_custom_call.1} parent=1 // loop_footer
      %s18 = sadd.s32 1, %s14
    $region7: #{tpu_custom_call.1} parent=1 // loop_footer_branch
      %13 = sbr.rel target = $region3
    $region8: #{tpu_custom_call.1} parent=1 // loop_exit
      _
    %397 = vsyncpa [#allocation3], 1
    %s398 = scalar_lea.sflag [#allocation3], 1
    %399 = vsyncpa %s398, 1
    %400 = vsyncpa [#allocation4], 1
    %s401 = scalar_lea.sflag [#allocation4], 1
    %402 = vsyncpa %s401, 1
    %403 = vsyncpa [#allocation7], 1

</llo_original>
